<compile_context>
chip_gen: v6e
topology: v6e:2x2x1
jax: 0.10.0
libtpu: 0.0.40
codegen_flags: <defaults>
</compile_context>

<pallas_src>
import jax
import jax.numpy as jnp
from jax.experimental import pallas as pl
from jax.experimental.pallas import tpu as pltpu


def _fused_residual_block_kernel(x_ref, t1_ref, b1_ref, t2_ref, b2_ref,
                                 mtop_ref, mbot_ref, out_ref):
    """conv1+bias+ReLU, conv2+bias, *0.5 + residual, for TB stacked images.

    x_ref   : (M, L)     M = TB * (H/RG) super-rows, L = RG*W*C lanes
    t*_ref  : (3, L, L)  group-Toeplitz weights for group offsets -1 / 0 / +1
    b*_ref  : (1, L)     bias tiled across (RG, W)
    mtop_ref: (M, 1)     0.0 on the first super-row of each image, else 1.0
    mbot_ref: (M, 1)     0.0 on the last  super-row of each image, else 1.0
    out_ref : (M, L)
    """
    M, L = out_ref.shape
    x = x_ref[...]                       # native dtype; MXU accumulates in f32
    m_top = mtop_ref[...]
    m_bot = mbot_ref[...]

    def conv3x3(inp, t_ref):
        # Horizontal taps + horizontal zero-pad live inside the Toeplitz slabs;
        # vertical (super-row) taps are 3 matmuls + XLU sublane rotates.
        d_m1 = jnp.dot(inp, t_ref[0], preferred_element_type=jnp.float32)  # from row g-1
        d_0 = jnp.dot(inp, t_ref[1], preferred_element_type=jnp.float32)   # from row g
        d_p1 = jnp.dot(inp, t_ref[2], preferred_element_type=jnp.float32)  # from row g+1
        # out[g] += d_m1[g-1]: rotate down one sublane, zero image-top rows.
        from_above = pltpu.roll(d_m1, shift=1, axis=0) * m_top
        # out[g] += d_p1[g+1]: rotate up one sublane, zero image-bottom rows.
        from_below = pltpu.roll(d_p1, shift=M - 1, axis=0) * m_bot
        return from_above + d_0 + from_below                  # f32 accumulator

    # conv1 + bias + ReLU (intermediate kept in f32 per review).
    h = jnp.maximum(conv3x3(x, t1_ref) + b1_ref[...], 0.0)    # (M, L) f32
    # conv2 + bias, then *0.5 + residual (residual reuses the loaded x tile).
    o = conv3x3(h, t2_ref) + b2_ref[...]
    o = o * 0.5 + x.astype(jnp.float32)
    out_ref[...] = o.astype(out_ref.dtype)


def _group_toeplitz_weights(w_hwio, width, rg):
    """(KH, KW, Ci, Co) HWIO conv weights -> (3, rg*W*Ci, rg*W*Co) slabs.

    Image rows are packed rg at a time onto the lane axis; slab d holds the
    contribution of super-row g + (d - 1) to super-row g of a stride-1, pad-1
    convolution:    out_group[g] = sum_d  x_group[g + d - 1] @ T[d]
    (out-of-range super-rows are zeroed by the kernel-side boundary masks).
    Horizontal zero padding appears as structural zeros inside each slab.
    """
    KH, KW, Ci, Co = w_hwio.shape
    pad_h, pad_w = (KH - 1) // 2, (KW - 1) // 2
    ri = jnp.arange(rg)                       # in-group input row
    ro = jnp.arange(rg)                       # in-group output row
    dg = jnp.arange(-1, 2)                    # super-row offset
    kh = dg[:, None, None] * rg + ri[None, :, None] - ro[None, None, :] + pad_h
    kw = jnp.arange(width)[:, None] - jnp.arange(width)[None, :] + pad_w
    kh_ok = (kh >= 0) & (kh < KH)             # (3, rg, rg)
    kw_ok = (kw >= 0) & (kw < KW)             # (W, W)
    t = w_hwio[jnp.clip(kh, 0, KH - 1)]       # (3, rg, rg, KW, Ci, Co)
    t = t[:, :, :, jnp.clip(kw, 0, KW - 1)]   # (3, rg, rg, W, W, Ci, Co)
    valid = kh_ok[:, :, :, None, None] & kw_ok[None, None, None, :, :]
    t = t * valid[..., None, None].astype(w_hwio.dtype)
    # (d, ri, ro, wi, wo, ci, co) -> (d, ri, wi, ci, ro, wo, co)
    t = jnp.transpose(t, (0, 1, 3, 5, 2, 4, 6))
    return t.reshape(3, rg * width * Ci, rg * width * Co)


def _pick_row_group(H, WC, max_lane=512):
    """Smallest divisor rg of H with rg*WC >= 128 (capped at max_lane lanes)."""
    rg = 1
    for cand in range(1, H + 1):
        if H % cand or cand * WC > max_lane:
            continue
        rg = cand
        if cand * WC >= 128:
            break
    return rg


def _pick_batch_tile(B, HR, target_rows=256):
    """Largest divisor TB of B with TB*HR <= target_rows, keeping the grid
    length >= 2 when B >= 2 so both v7x TensorCores get work."""
    best = 1
    for tb in range(1, B + 1):
        if B % tb:
            continue
        if tb * HR <= target_rows and (B < 2 or B // tb >= 2):
            best = tb
    return best


def residual_block_nhwc(x_nhwc, w1_hwio, b1, w2_hwio, b2):
    """Fused ResidualBlock on NHWC input (preferred layout; no transposes)."""
    B, H, W, C = x_nhwc.shape
    WC = W * C
    dtype = x_nhwc.dtype

    rg = _pick_row_group(H, WC)               # rows packed per super-row
    HR = H // rg                              # super-rows per image
    L = rg * WC                               # lane width (>=128 when possible)
    TB = _pick_batch_tile(B, HR)              # images per grid step
    M = TB * HR                               # rows per block

    # Bitwise reshape: rg consecutive rows flattened onto the lane axis.
    x2d = x_nhwc.reshape(B * HR, L)

    # Tiny XLA-side precompute (weights are (3, L, L) = 192 KB here).
    t1 = _group_toeplitz_weights(w1_hwio, W, rg)
    t2 = _group_toeplitz_weights(w2_hwio, W, rg)
    b1t = jnp.tile(b1, rg * W).reshape(1, L)
    b2t = jnp.tile(b2, rg * W).reshape(1, L)

    # Per-row image-boundary masks (zero the wrapped / cross-image rows after
    # the sublane roll); one block's worth, reused by every grid step.
    grp = jnp.arange(M) % HR
    m_top = (grp != 0).astype(jnp.float32).reshape(M, 1)
    m_bot = (grp != HR - 1).astype(jnp.float32).reshape(M, 1)

    flops = 2 * 2 * 3 * (B * HR) * L * L
    bytes_accessed = int(
        2 * x2d.size * x2d.dtype.itemsize            # read x, write out
        + (t1.size + t2.size) * t1.dtype.itemsize
        + (b1t.size + b2t.size + m_top.size + m_bot.size) * 4)
    cost = pl.CostEstimate(flops=flops, transcendentals=0,
                           bytes_accessed=bytes_accessed)

    grid_spec = pltpu.PrefetchScalarGridSpec(
        num_scalar_prefetch=0,
        grid=(B // TB,),                                   # TB images per step
        in_specs=[
            pl.BlockSpec((M, L), lambda b: (b, 0)),        # x (TB images)
            pl.BlockSpec((3, L, L), lambda b: (0, 0, 0)),  # conv1 weights
            pl.BlockSpec((1, L), lambda b: (0, 0)),        # conv1 bias
            pl.BlockSpec((3, L, L), lambda b: (0, 0, 0)),  # conv2 weights
            pl.BlockSpec((1, L), lambda b: (0, 0)),        # conv2 bias
            pl.BlockSpec((M, 1), lambda b: (0, 0)),        # image-top mask
            pl.BlockSpec((M, 1), lambda b: (0, 0)),        # image-bottom mask
        ],
        out_specs=pl.BlockSpec((M, L), lambda b: (b, 0)),
    )

    out2d = pl.pallas_call(
        _fused_residual_block_kernel,
        out_shape=jax.ShapeDtypeStruct((B * HR, L), dtype),
        grid_spec=grid_spec,
        compiler_params=pltpu.CompilerParams(
            dimension_semantics=("parallel",),     # megacore: images across TCs
            vmem_limit_bytes=32 * 1024 * 1024,
        ),
        cost_estimate=cost,
    )(x2d, t1, b1t, t2, b2t, m_top, m_bot)

    return out2d.reshape(B, H, W, C)


@jax.jit
def residual_block(x_nchw, w1_oihw, b1, w2_oihw, b2):
    """PyTorch-facing entry point: NCHW input, OIHW weights, NCHW output.

    (If the caller can supply/consume NHWC, call residual_block_nhwc directly
    and skip the two HBM-round-trip transposes below.)
    """
    x_nhwc = jnp.transpose(x_nchw, (0, 2, 3, 1))
    w1 = jnp.transpose(w1_oihw, (2, 3, 1, 0))  # OIHW -> HWIO
    w2 = jnp.transpose(w2_oihw, (2, 3, 1, 0))
    out_nhwc = residual_block_nhwc(x_nhwc, w1, b1, w2, b2)
    return jnp.transpose(out_nhwc, (0, 3, 1, 2))


def _reference(x, w1, b1, w2, b2):
    """Pure-JAX NCHW reference matching the PyTorch forward."""
    dn = jax.lax.conv_dimension_numbers(x.shape, w1.shape,
                                        ("NCHW", "OIHW", "NCHW"))
    c1 = jax.lax.conv_general_dilated(x, w1, (1, 1), "SAME",
                                      dimension_numbers=dn,
                                      precision=jax.lax.Precision.HIGHEST)
    h = jnp.maximum(c1 + b1[None, :, None, None], 0.0)
    c2 = jax.lax.conv_general_dilated(h, w2, (1, 1), "SAME",
                                      dimension_numbers=dn,
                                      precision=jax.lax.Precision.HIGHEST)
    return (c2 + b2[None, :, None, None]) * 0.5 + x


if __name__ == "__main__":
    B, C, H, W = 2, 4, 16, 16  # PyTorch-style (B, C, H, W) input

    key = jax.random.PRNGKey(0)
    kx, k1w, k1b, k2w, k2b = jax.random.split(key, 5)

    # Deterministic init mimicking nn.Conv2d defaults (uniform +/- 1/sqrt(fan_in)).
    fan_in = C * 3 * 3
    bound = 1.0 / (fan_in ** 0.5)
    x = jax.random.normal(kx, (B, C, H, W), dtype=jnp.float32)
    w1 = jax.random.uniform(k1w, (C, C, 3, 3), jnp.float32, -bound, bound)
    b1 = jax.random.uniform(k1b, (C,), jnp.float32, -bound, bound)
    w2 = jax.random.uniform(k2w, (C, C, 3, 3), jnp.float32, -bound, bound)
    b2 = jax.random.uniform(k2b, (C,), jnp.float32, -bound, bound)

    out = jax.block_until_ready(residual_block(x, w1, b1, w2, b2))

    ref = _reference(x, w1, b1, w2, b2)
    assert out.shape == (B, C, H, W)
    max_err = float(jnp.max(jnp.abs(out - ref)))
    assert jnp.allclose(out, ref, atol=1e-5, rtol=1e-5), max_err

    print("KERNEL_OK")
</pallas_src>

<mosaic_0001>
module attributes {stable_mosaic.version = 11 : i64} {
  func.func @_fused_residual_block_kernel(%arg0: i32, %arg1: memref<8x128xf32, #tpu.memory_space<vmem>>, %arg2: memref<3x128x128xf32, #tpu.memory_space<vmem>>, %arg3: memref<1x128xf32, #tpu.memory_space<vmem>>, %arg4: memref<3x128x128xf32, #tpu.memory_space<vmem>>, %arg5: memref<1x128xf32, #tpu.memory_space<vmem>>, %arg6: memref<8x1xf32, #tpu.memory_space<vmem>>, %arg7: memref<8x1xf32, #tpu.memory_space<vmem>>, %arg8: memref<8x128xf32, #tpu.memory_space<vmem>>) attributes {dimension_semantics = [#tpu.dimension_semantics<parallel>], iteration_bounds = array<i64: 2>, scalar_prefetch = 0 : i64, scratch_operands = 0 : i64, tpu.core_type = #tpu.core_type<tc>, window_params = [{transform_indices = @transform_0, window_bounds = array<i64: 8, 128>}, {pipeline_mode = #tpu.pipeline_mode<synchronous>, transform_indices = @transform_1, window_bounds = array<i64: 3, 128, 128>}, {pipeline_mode = #tpu.pipeline_mode<synchronous>, transform_indices = @transform_2, window_bounds = array<i64: 1, 128>}, {pipeline_mode = #tpu.pipeline_mode<synchronous>, transform_indices = @transform_3, window_bounds = array<i64: 3, 128, 128>}, {pipeline_mode = #tpu.pipeline_mode<synchronous>, transform_indices = @transform_4, window_bounds = array<i64: 1, 128>}, {pipeline_mode = #tpu.pipeline_mode<synchronous>, transform_indices = @transform_5, window_bounds = array<i64: 8, 1>}, {pipeline_mode = #tpu.pipeline_mode<synchronous>, transform_indices = @transform_6, window_bounds = array<i64: 8, 1>}, {transform_indices = @transform_7, window_bounds = array<i64: 8, 128>}]} {
    %c0 = arith.constant 0 : index
    %c0_0 = arith.constant 0 : index
    %0 = vector.load %arg1[%c0, %c0_0] : memref<8x128xf32, #tpu.memory_space<vmem>>, vector<8x128xf32>
    %c0_1 = arith.constant 0 : index
    %c0_2 = arith.constant 0 : index
    %1 = vector.load %arg6[%c0_1, %c0_2] : memref<8x1xf32, #tpu.memory_space<vmem>>, vector<8x1xf32>
    %c0_3 = arith.constant 0 : index
    %c0_4 = arith.constant 0 : index
    %2 = vector.load %arg7[%c0_3, %c0_4] : memref<8x1xf32, #tpu.memory_space<vmem>>, vector<8x1xf32>
    %c0_5 = arith.constant 0 : index
    %c0_6 = arith.constant 0 : index
    %c0_7 = arith.constant 0 : index
    %3 = vector.load %arg2[%c0_5, %c0_6, %c0_7] : memref<3x128x128xf32, #tpu.memory_space<vmem>>, vector<1x128x128xf32>
    %4 = vector.shape_cast %3 : vector<1x128x128xf32> to vector<128x128xf32>
    %cst = arith.constant dense<0.000000e+00> : vector<8x128xf32>
    %5 = tpu.matmul %0, %4, %cst {dimension_numbers = #tpu.dot_dimension_numbers<[1], [0], [0], [1], [0, 0, 1, 1], [], []>} : vector<8x128xf32>, vector<128x128xf32>, vector<8x128xf32> -> vector<8x128xf32>
    %c1 = arith.constant 1 : index
    %c0_8 = arith.constant 0 : index
    %c0_9 = arith.constant 0 : index
    %6 = vector.load %arg2[%c1, %c0_8, %c0_9] : memref<3x128x128xf32, #tpu.memory_space<vmem>>, vector<1x128x128xf32>
    %7 = vector.shape_cast %6 : vector<1x128x128xf32> to vector<128x128xf32>
    %cst_10 = arith.constant dense<0.000000e+00> : vector<8x128xf32>
    %8 = tpu.matmul %0, %7, %cst_10 {dimension_numbers = #tpu.dot_dimension_numbers<[1], [0], [0], [1], [0, 0, 1, 1], [], []>} : vector<8x128xf32>, vector<128x128xf32>, vector<8x128xf32> -> vector<8x128xf32>
    %c2 = arith.constant 2 : index
    %c0_11 = arith.constant 0 : index
    %c0_12 = arith.constant 0 : index
    %9 = vector.load %arg2[%c2, %c0_11, %c0_12] : memref<3x128x128xf32, #tpu.memory_space<vmem>>, vector<1x128x128xf32>
    %10 = vector.shape_cast %9 : vector<1x128x128xf32> to vector<128x128xf32>
    %cst_13 = arith.constant dense<0.000000e+00> : vector<8x128xf32>
    %11 = tpu.matmul %0, %10, %cst_13 {dimension_numbers = #tpu.dot_dimension_numbers<[1], [0], [0], [1], [0, 0, 1, 1], [], []>} : vector<8x128xf32>, vector<128x128xf32>, vector<8x128xf32> -> vector<8x128xf32>
    %c1_i32 = arith.constant 1 : i32
    %12 = tpu.dynamic_rotate %5 by %c1_i32 dim 0 : vector<8x128xf32>, i32 -> vector<8x128xf32>
    %13 = vector.broadcast %1 : vector<8x1xf32> to vector<8x128xf32>
    %14 = arith.mulf %12, %13 : vector<8x128xf32>
    %c7_i32 = arith.constant 7 : i32
    %15 = tpu.dynamic_rotate %11 by %c7_i32 dim 0 : vector<8x128xf32>, i32 -> vector<8x128xf32>
    %16 = vector.broadcast %2 : vector<8x1xf32> to vector<8x128xf32>
    %17 = arith.mulf %15, %16 : vector<8x128xf32>
    %18 = arith.addf %14, %8 : vector<8x128xf32>
    %19 = arith.addf %18, %17 : vector<8x128xf32>
    %c0_14 = arith.constant 0 : index
    %c0_15 = arith.constant 0 : index
    %20 = vector.load %arg3[%c0_14, %c0_15] : memref<1x128xf32, #tpu.memory_space<vmem>>, vector<1x128xf32>
    %21 = vector.broadcast %20 : vector<1x128xf32> to vector<8x128xf32>
    %22 = arith.addf %19, %21 : vector<8x128xf32>
    %cst_16 = arith.constant 0.000000e+00 : f32
    %23 = vector.broadcast %cst_16 : f32 to vector<8x128xf32>
    %24 = arith.maximumf %22, %23 : vector<8x128xf32>
    %c0_17 = arith.constant 0 : index
    %c0_18 = arith.constant 0 : index
    %c0_19 = arith.constant 0 : index
    %25 = vector.load %arg4[%c0_17, %c0_18, %c0_19] : memref<3x128x128xf32, #tpu.memory_space<vmem>>, vector<1x128x128xf32>
    %26 = vector.shape_cast %25 : vector<1x128x128xf32> to vector<128x128xf32>
    %cst_20 = arith.constant dense<0.000000e+00> : vector<8x128xf32>
    %27 = tpu.matmul %24, %26, %cst_20 {dimension_numbers = #tpu.dot_dimension_numbers<[1], [0], [0], [1], [0, 0, 1, 1], [], []>} : vector<8x128xf32>, vector<128x128xf32>, vector<8x128xf32> -> vector<8x128xf32>
    %c1_21 = arith.constant 1 : index
    %c0_22 = arith.constant 0 : index
    %c0_23 = arith.constant 0 : index
    %28 = vector.load %arg4[%c1_21, %c0_22, %c0_23] : memref<3x128x128xf32, #tpu.memory_space<vmem>>, vector<1x128x128xf32>
    %29 = vector.shape_cast %28 : vector<1x128x128xf32> to vector<128x128xf32>
    %cst_24 = arith.constant dense<0.000000e+00> : vector<8x128xf32>
    %30 = tpu.matmul %24, %29, %cst_24 {dimension_numbers = #tpu.dot_dimension_numbers<[1], [0], [0], [1], [0, 0, 1, 1], [], []>} : vector<8x128xf32>, vector<128x128xf32>, vector<8x128xf32> -> vector<8x128xf32>
    %c2_25 = arith.constant 2 : index
    %c0_26 = arith.constant 0 : index
    %c0_27 = arith.constant 0 : index
    %31 = vector.load %arg4[%c2_25, %c0_26, %c0_27] : memref<3x128x128xf32, #tpu.memory_space<vmem>>, vector<1x128x128xf32>
    %32 = vector.shape_cast %31 : vector<1x128x128xf32> to vector<128x128xf32>
    %cst_28 = arith.constant dense<0.000000e+00> : vector<8x128xf32>
    %33 = tpu.matmul %24, %32, %cst_28 {dimension_numbers = #tpu.dot_dimension_numbers<[1], [0], [0], [1], [0, 0, 1, 1], [], []>} : vector<8x128xf32>, vector<128x128xf32>, vector<8x128xf32> -> vector<8x128xf32>
    %c1_i32_29 = arith.constant 1 : i32
    %34 = tpu.dynamic_rotate %27 by %c1_i32_29 dim 0 : vector<8x128xf32>, i32 -> vector<8x128xf32>
    %35 = vector.broadcast %1 : vector<8x1xf32> to vector<8x128xf32>
    %36 = arith.mulf %34, %35 : vector<8x128xf32>
    %c7_i32_30 = arith.constant 7 : i32
    %37 = tpu.dynamic_rotate %33 by %c7_i32_30 dim 0 : vector<8x128xf32>, i32 -> vector<8x128xf32>
    %38 = vector.broadcast %2 : vector<8x1xf32> to vector<8x128xf32>
    %39 = arith.mulf %37, %38 : vector<8x128xf32>
    %40 = arith.addf %36, %30 : vector<8x128xf32>
    %41 = arith.addf %40, %39 : vector<8x128xf32>
    %c0_31 = arith.constant 0 : index
    %c0_32 = arith.constant 0 : index
    %42 = vector.load %arg5[%c0_31, %c0_32] : memref<1x128xf32, #tpu.memory_space<vmem>>, vector<1x128xf32>
    %43 = vector.broadcast %42 : vector<1x128xf32> to vector<8x128xf32>
    %44 = arith.addf %41, %43 : vector<8x128xf32>
    %cst_33 = arith.constant 5.000000e-01 : f32
    %45 = vector.broadcast %cst_33 : f32 to vector<8x128xf32>
    %46 = arith.mulf %44, %45 : vector<8x128xf32>
    %47 = arith.addf %46, %0 : vector<8x128xf32>
    %c0_34 = arith.constant 0 : index
    %c0_35 = arith.constant 0 : index
    %48 = vector.load %arg8[%c0_34, %c0_35] : memref<8x128xf32, #tpu.memory_space<vmem>>, vector<8x128xf32>
    tpu.vector_store %arg8[%c0_34, %c0_35], %47 {strides = array<i32>} : memref<8x128xf32, #tpu.memory_space<vmem>>, vector<8x128xf32>,
    return
  }
  func.func @transform_0(%arg0: i32) -> (i32, i32) {
    %c0_i32 = arith.constant 0 : i32
    %c0_i32_0 = arith.constant 0 : i32
    return %arg0, %c0_i32 : i32, i32
  }
  func.func @transform_1(%arg0: i32) -> (i32, i32, i32) {
    %c0_i32 = arith.constant 0 : i32
    %c0_i32_0 = arith.constant 0 : i32
    %c0_i32_1 = arith.constant 0 : i32
    %c0_i32_2 = arith.constant 0 : i32
    return %c0_i32, %c0_i32_0, %c0_i32_1 : i32, i32, i32
  }
  func.func @transform_2(%arg0: i32) -> (i32, i32) {
    %c0_i32 = arith.constant 0 : i32
    %c0_i32_0 = arith.constant 0 : i32
    %c0_i32_1 = arith.constant 0 : i32
    return %c0_i32, %c0_i32_0 : i32, i32
  }
  func.func @transform_3(%arg0: i32) -> (i32, i32, i32) {
    %c0_i32 = arith.constant 0 : i32
    %c0_i32_0 = arith.constant 0 : i32
    %c0_i32_1 = arith.constant 0 : i32
    %c0_i32_2 = arith.constant 0 : i32
    return %c0_i32, %c0_i32_0, %c0_i32_1 : i32, i32, i32
  }
  func.func @transform_4(%arg0: i32) -> (i32, i32) {
    %c0_i32 = arith.constant 0 : i32
    %c0_i32_0 = arith.constant 0 : i32
    %c0_i32_1 = arith.constant 0 : i32
    return %c0_i32, %c0_i32_0 : i32, i32
  }
  func.func @transform_5(%arg0: i32) -> (i32, i32) {
    %c0_i32 = arith.constant 0 : i32
    %c0_i32_0 = arith.constant 0 : i32
    %c0_i32_1 = arith.constant 0 : i32
    return %c0_i32, %c0_i32_0 : i32, i32
  }
  func.func @transform_6(%arg0: i32) -> (i32, i32) {
    %c0_i32 = arith.constant 0 : i32
    %c0_i32_0 = arith.constant 0 : i32
    %c0_i32_1 = arith.constant 0 : i32
    return %c0_i32, %c0_i32_0 : i32, i32
  }
  func.func @transform_7(%arg0: i32) -> (i32, i32) {
    %c0_i32 = arith.constant 0 : i32
    %c0_i32_0 = arith.constant 0 : i32
    return %arg0, %c0_i32 : i32, i32
  }
}

</mosaic_0001>

<llo_original>
// kernel: tile.13
$region0: #{tile.13}
  #allocation0 [shape = 's32[1]{0}', space=sflag, size = 0x4, scoped, tag = 'scoped memory for tile.13']
  %s0 = inlined_call_operand.vmem [shape: f32[4], index: 0, kind: input, shape index: {}]
  %s1 = inlined_call_operand.vmem [shape: f32[32,4], index: 1, kind: output, shape index: {}]
  // Predicated region
  $region2: #{tile.13} parent=0 // pred_check
    _
  $region3: #{tile.13} parent=0 // pred_check_branch
    %3 = sbr.rel (0) target = $region5
  $region4: #{tile.13} parent=0 // pred_region
    _
  $region5: #{tile.13} parent=0 // pred_fallthru
    _
  %v4 = vld [vmem:[%s0] ss:$0 sm:$0xff]
  %5 = vst [vmem:[%s1] sm:$0xff] %v4
  %s6 = scalar_lea.vmem %s1, 8
  %7 = vst [vmem:[%s6] sm:$0xff] %v4
  %s8 = scalar_lea.vmem %s1, 16
  %9 = vst [vmem:[%s8] sm:$0xff] %v4
  %s10 = scalar_lea.vmem %s1, 24
  %11 = vst [vmem:[%s10] sm:$0xff] %v4

// kernel: tile.14
$region0: #{tile.14}
  %s0 = inlined_call_operand.vmem [shape: f32[32,4], index: 0, kind: input, shape index: {}]
  %s1 = inlined_call_operand.vmem [shape: f32[1,128], index: 1, kind: output, shape index: {}]
  $region1: #{tile.14} parent=0
    #allocation0 [shape = 'u8[4096]{0}', space=vmem, size = 0x1000, scoped, tag = 'scoped mem for output reshape']
    %v2 = vld [vmem:[%s0] sm:$0x1]
    %vm3 = vcmask 31744
    %4 = vst.msk [vmem:[#allocation0] sm:$0x1] %vm3, %v2
    %s5 = scalar_lea.vmem %s0, 31
    %v6 = vld [vmem:[%s5] sm:$0x1]
    %7 = vrot.lane.b32.xlu0 %v6, 124
    %v8 = vpop.permute.xlu0 %7
    %vm9 = vcmask 1048544
    %10 = vst.msk [vmem:[#allocation0] sm:$0x1] %vm9, %v8
    %s11 = scalar_lea.vmem %s0, 30
    %v12 = vld [vmem:[%s11] sm:$0x1]
    %13 = vrot.lane.b32.xlu0 %v12, 120
    %v14 = vpop.permute.xlu0 %13
    %vm15 = vcmask 1015744
    %16 = vst.msk [vmem:[#allocation0] sm:$0x1] %vm15, %v14
    %s17 = scalar_lea.vmem %s0, 29
    %v18 = vld [vmem:[%s17] sm:$0x1]
    %19 = vrot.lane.b32.xlu0 %v18, 116
    %v20 = vpop.permute.xlu0 %19
    %vm21 = vcmask 982944
    %22 = vst.msk [vmem:[#allocation0] sm:$0x1] %vm21, %v20
    %s23 = scalar_lea.vmem %s0, 28
    %v24 = vld [vmem:[%s23] sm:$0x1]
    %25 = vrot.lane.b32.xlu0 %v24, 112
    %v26 = vpop.permute.xlu0 %25
    %vm27 = vcmask 950144
    %28 = vst.msk [vmem:[#allocation0] sm:$0x1] %vm27, %v26
    %s29 = scalar_lea.vmem %s0, 27
    %v30 = vld [vmem:[%s29] sm:$0x1]
    %31 = vrot.lane.b32.xlu0 %v30, 108
    %v32 = vpop.permute.xlu0 %31
    %vm33 = vcmask 917344
    %34 = vst.msk [vmem:[#allocation0] sm:$0x1] %vm33, %v32
    %s35 = scalar_lea.vmem %s0, 26
    %v36 = vld [vmem:[%s35] sm:$0x1]
    %37 = vrot.lane.b32.xlu0 %v36, 104
    %v38 = vpop.permute.xlu0 %37
    %vm39 = vcmask 884544
    %40 = vst.msk [vmem:[#allocation0] sm:$0x1] %vm39, %v38
    %s41 = scalar_lea.vmem %s0, 25
    %v42 = vld [vmem:[%s41] sm:$0x1]
    %43 = vrot.lane.b32.xlu0 %v42, 100
    %v44 = vpop.permute.xlu0 %43
    %vm45 = vcmask 851744
    %46 = vst.msk [vmem:[#allocation0] sm:$0x1] %vm45, %v44
    %s47 = scalar_lea.vmem %s0, 24
    %v48 = vld [vmem:[%s47] sm:$0x1]
    %49 = vrot.lane.b32.xlu0 %v48, 96
    %v50 = vpop.permute.xlu0 %49
    %vm51 = vcmask 818944
    %52 = vst.msk [vmem:[#allocation0] sm:$0x1] %vm51, %v50
    %s53 = scalar_lea.vmem %s0, 23
    %v54 = vld [vmem:[%s53] sm:$0x1]
    %55 = vrot.lane.b32.xlu0 %v54, 92
    %v56 = vpop.permute.xlu0 %55
    %vm57 = vcmask 786144
    %58 = vst.msk [vmem:[#allocation0] sm:$0x1] %vm57, %v56
    %s59 = scalar_lea.vmem %s0, 22
    %v60 = vld [vmem:[%s59] sm:$0x1]
    %61 = vrot.lane.b32.xlu0 %v60, 88
    %v62 = vpop.permute.xlu0 %61
    %vm63 = vcmask 753344
    %64 = vst.msk [vmem:[#allocation0] sm:$0x1] %vm63, %v62
    %s65 = scalar_lea.vmem %s0, 21
    %v66 = vld [vmem:[%s65] sm:$0x1]
    %67 = vrot.lane.b32.xlu0 %v66, 84
    %v68 = vpop.permute.xlu0 %67
    %vm69 = vcmask 720544
    %70 = vst.msk [vmem:[#allocation0] sm:$0x1] %vm69, %v68
    %s71 = scalar_lea.vmem %s0, 20
    %v72 = vld [vmem:[%s71] sm:$0x1]
    %73 = vrot.lane.b32.xlu0 %v72, 80
    %v74 = vpop.permute.xlu0 %73
    %vm75 = vcmask 687744
    %76 = vst.msk [vmem:[#allocation0] sm:$0x1] %vm75, %v74
    %s77 = scalar_lea.vmem %s0, 19
    %v78 = vld [vmem:[%s77] sm:$0x1]
    %79 = vrot.lane.b32.xlu0 %v78, 76
    %v80 = vpop.permute.xlu0 %79
    %vm81 = vcmask 654944
    %82 = vst.msk [vmem:[#allocation0] sm:$0x1] %vm81, %v80
    %s83 = scalar_lea.vmem %s0, 18
    %v84 = vld [vmem:[%s83] sm:$0x1]
    %85 = vrot.lane.b32.xlu0 %v84, 72
    %v86 = vpop.permute.xlu0 %85
    %vm87 = vcmask 622144
    %88 = vst.msk [vmem:[#allocation0] sm:$0x1] %vm87, %v86
    %s89 = scalar_lea.vmem %s0, 17
    %v90 = vld [vmem:[%s89] sm:$0x1]
    %91 = vrot.lane.b32.xlu0 %v90, 68
    %v92 = vpop.permute.xlu0 %91
    %vm93 = vcmask 589344
    %94 = vst.msk [vmem:[#allocation0] sm:$0x1] %vm93, %v92
    %s95 = scalar_lea.vmem %s0, 16
    %v96 = vld [vmem:[%s95] sm:$0x1]
    %97 = vrot.lane.b32.xlu0 %v96, 64
    %v98 = vpop.permute.xlu0 %97
    %vm99 = vcmask 556544
    %100 = vst.msk [vmem:[#allocation0] sm:$0x1] %vm99, %v98
    %s101 = scalar_lea.vmem %s0, 15
    %v102 = vld [vmem:[%s101] sm:$0x1]
    %103 = vrot.lane.b32.xlu0 %v102, 60
    %v104 = vpop.permute.xlu0 %103
    %vm105 = vcmask 523744
    %106 = vst.msk [vmem:[#allocation0] sm:$0x1] %vm105, %v104
    %s107 = scalar_lea.vmem %s0, 14
    %v108 = vld [vmem:[%s107] sm:$0x1]
    %109 = vrot.lane.b32.xlu0 %v108, 56
    %v110 = vpop.permute.xlu0 %109
    %vm111 = vcmask 490944
    %112 = vst.msk [vmem:[#allocation0] sm:$0x1] %vm111, %v110
    %s113 = scalar_lea.vmem %s0, 13
    %v114 = vld [vmem:[%s113] sm:$0x1]
    %115 = vrot.lane.b32.xlu0 %v114, 52
    %v116 = vpop.permute.xlu0 %115
    %vm117 = vcmask 458144
    %118 = vst.msk [vmem:[#allocation0] sm:$0x1] %vm117, %v116
    %s119 = scalar_lea.vmem %s0, 12
    %v120 = vld [vmem:[%s119] sm:$0x1]
    %121 = vrot.lane.b32.xlu0 %v120, 48
    %v122 = vpop.permute.xlu0 %121
    %vm123 = vcmask 425344
    %124 = vst.msk [vmem:[#allocation0] sm:$0x1] %vm123, %v122
    %s125 = scalar_lea.vmem %s0, 11
    %v126 = vld [vmem:[%s125] sm:$0x1]
    %127 = vrot.lane.b32.xlu0 %v126, 44
    %v128 = vpop.permute.xlu0 %127
    %vm129 = vcmask 392544
    %130 = vst.msk [vmem:[#allocation0] sm:$0x1] %vm129, %v128
    %s131 = scalar_lea.vmem %s0, 10
    %v132 = vld [vmem:[%s131] sm:$0x1]
    %133 = vrot.lane.b32.xlu0 %v132, 40
    %v134 = vpop.permute.xlu0 %133
    %vm135 = vcmask 359744
    %136 = vst.msk [vmem:[#allocation0] sm:$0x1] %vm135, %v134
    %s137 = scalar_lea.vmem %s0, 9
    %v138 = vld [vmem:[%s137] sm:$0x1]
    %139 = vrot.lane.b32.xlu0 %v138, 36
    %v140 = vpop.permute.xlu0 %139
    %vm141 = vcmask 326944
    %142 = vst.msk [vmem:[#allocation0] sm:$0x1] %vm141, %v140
    %s143 = scalar_lea.vmem %s0, 8
    %v144 = vld [vmem:[%s143] sm:$0x1]
    %145 = vrot.lane.b32.xlu0 %v144, 32
    %v146 = vpop.permute.xlu0 %145
    %vm147 = vcmask 294144
    %148 = vst.msk [vmem:[#allocation0] sm:$0x1] %vm147, %v146
    %s149 = scalar_lea.vmem %s0, 7
    %v150 = vld [vmem:[%s149] sm:$0x1]
    %151 = vrot.lane.b32.xlu0 %v150, 28
    %v152 = vpop.permute.xlu0 %151
    %vm153 = vcmask 261344
    %154 = vst.msk [vmem:[#allocation0] sm:$0x1] %vm153, %v152
    %s155 = scalar_lea.vmem %s0, 6
    %v156 = vld [vmem:[%s155] sm:$0x1]
    %157 = vrot.lane.b32.xlu0 %v156, 24
    %v158 = vpop.permute.xlu0 %157
    %vm159 = vcmask 228544
    %160 = vst.msk [vmem:[#allocation0] sm:$0x1] %vm159, %v158
    %s161 = scalar_lea.vmem %s0, 5
    %v162 = vld [vmem:[%s161] sm:$0x1]
    %163 = vrot.lane.b32.xlu0 %v162, 20
    %v164 = vpop.permute.xlu0 %163
    %vm165 = vcmask 195744
    %166 = vst.msk [vmem:[#allocation0] sm:$0x1] %vm165, %v164
    %s167 = scalar_lea.vmem %s0, 4
    %v168 = vld [vmem:[%s167] sm:$0x1]
    %169 = vrot.lane.b32.xlu0 %v168, 16
    %v170 = vpop.permute.xlu0 %169
    %vm171 = vcmask 162944
    %172 = vst.msk [vmem:[#allocation0] sm:$0x1] %vm171, %v170
    %s173 = scalar_lea.vmem %s0, 3
    %v174 = vld [vmem:[%s173] sm:$0x1]
    %175 = vrot.lane.b32.xlu0 %v174, 12
    %v176 = vpop.permute.xlu0 %175
    %vm177 = vcmask 130144
    %178 = vst.msk [vmem:[#allocation0] sm:$0x1] %vm177, %v176
    %s179 = scalar_lea.vmem %s0, 2
    %v180 = vld [vmem:[%s179] sm:$0x1]
    %181 = vrot.lane.b32.xlu0 %v180, 8
    %v182 = vpop.permute.xlu0 %181
    %vm183 = vcmask 97344
    %184 = vst.msk [vmem:[#allocation0] sm:$0x1] %vm183, %v182
    %s185 = scalar_lea.vmem %s0, 1
    %v186 = vld [vmem:[%s185] sm:$0x1]
    %187 = vrot.lane.b32.xlu0 %v186, 4
    %v188 = vpop.permute.xlu0 %187
    %vm189 = vcmask 64544
    %190 = vst.msk [vmem:[#allocation0] sm:$0x1] %vm189, %v188
    %s192 = sshll.u32 1, 1
    %s193 = ssub.s32 %s192, 1
    %v195 = vld [vmem:[#allocation0] sm:%s193]
    %s196 = sshll.u32 1, 1
    %s197 = ssub.s32 %s196, 1
    %198 = vst [vmem:[%s1] sm:%s197] %v195

// kernel: residual_block.1
$region0: #{residual_block.1}
  #allocation0 [shape = 'u32[]', space=smem, size = 0x4, offset = 0x4, fixed_abs, tag = 'smem constant byte address 0x4 - core index']
  #allocation1 [shape = 'u32[144,128]{1,0:T(1,128)}', space=vmem, size = 0x12000, scoped, tag = 'internal scratch']
  %s0 = inlined_call_operand.vmem [shape: f32[16,128], index: 0, kind: input, shape index: {}]
  %s1 = inlined_call_operand.vmem [shape: f32[3,128,128], index: 1, kind: input, shape index: {}]
  %s2 = inlined_call_operand.vmem [shape: f32[1,128], index: 2, kind: input, shape index: {}]
  %s3 = inlined_call_operand.vmem [shape: f32[3,128,128], index: 3, kind: input, shape index: {}]
  %s4 = inlined_call_operand.vmem [shape: f32[1,128], index: 4, kind: input, shape index: {}]
  %s5 = inlined_call_operand.vmem [shape: f32[8,1], index: 5, kind: input, shape index: {}]
  %s6 = inlined_call_operand.vmem [shape: f32[8,1], index: 6, kind: input, shape index: {}]
  %s7 = inlined_call_operand.vmem [shape: f32[16,128], index: 7, kind: output, shape index: {}]
  %s8 = sld [smem:[#allocation0]]
  $region61: #{residual_block.1} parent=0
    _
  %s10 = ssub.s32 1, %s8
  %s11 = scalar_select 0, %s10, %s8
  loop: start=0, step=1, limit=4
  $region2: #{residual_block.1} parent=0 // loop_pre_header
    _
  $region3: #{residual_block.1} parent=0 // loop_header
    %s13 = sphi 0, %s17
    %p14 = scmp.ge.s32.totalorder %s13, 4
    %s23 = sphi 0, %s25
    %s26 = sphi 0, %s23
    %s27 = sphi 0, %s26
    %s43 = sphi 0, %s27
    %s47 = sphi 0, %s47
    %s49 = sphi 0, %s47
    %s50 = sphi 0, %s49
    %s64 = sphi 0, %s50
    %s68 = sphi 0, %s68
    %s70 = sphi 0, %s68
    %s71 = sphi 0, %s70
    %s85 = sphi 0, %s71
    %s89 = sphi 0, %s89
    %s91 = sphi 0, %s89
    %s92 = sphi 0, %s91
    %s106 = sphi 0, %s92
    %s110 = sphi 0, %s110
    %s112 = sphi 0, %s110
    %s113 = sphi 0, %s112
    %s127 = sphi 0, %s113
    %s131 = sphi 0, %s131
    %s133 = sphi 0, %s131
    %s134 = sphi 0, %s133
    %s148 = sphi 0, %s134
    %s152 = sphi 0, %s152
    %s154 = sphi 0, %s152
    %s155 = sphi 0, %s154
    %s169 = sphi 0, %s155
    %s175 = sphi 0, %s177
    %s178 = sphi 0, %s175
    %s179 = sphi 0, %s178
    %s195 = sphi 0, %s179
  $region4: #{residual_block.1} parent=0 // loop_header_branch
    %16 = sbr.rel (%p14) target = $region8
  $region5: #{residual_block.1} parent=0 // loop_body
    %s18 = ssub.s32 %s13, 1
    %s19 = ssub.s32 %s13, 2
    %s20 = sadd.s32 %s13, 1
    %s21 = ssub.s32 %s13, %s20
    %p22 = scmp.eq.s32.totalorder %s21, 0
    %s24 = sadd.s32 %s23, 1
    %s25 = scalar_select %p22, %s23, %s24
    %p28 = pneg %p22
    %p29 = scmp.eq.s32.totalorder %s13, 1
    %p30 = por %p28, %p29
    %p31 = scmp.ne.s32.totalorder %s23, %s26
    %p32 = scmp.eq.s32.totalorder %s13, 0
    %p33 = por %p31, %p32
    %p34 = scmp.ne.s32.totalorder %s23, %s26
    %p35 = scmp.eq.s32.totalorder %s18, 1
    %p36 = por %p34, %p35
    %p37 = scmp.ne.s32.totalorder %s26, %s27
    %p38 = scmp.eq.s32.totalorder %s18, 0
    %p39 = por %p37, %p38
    %p40 = scmp.ne.s32.totalorder %s26, %s27
    %p41 = scmp.eq.s32.totalorder %s19, 1
    %p42 = por %p40, %p41
    %p44 = scmp.ne.s32.totalorder %s27, %s43
    %p45 = scmp.eq.s32.totalorder %s19, 0
    %p46 = por %p44, %p45
    %s48 = sadd.s32 %s47, 1
    %p51 = scmp.eq.s32.totalorder %s13, 1
    %p52 = scmp.ne.s32.totalorder %s47, %s49
    %p53 = scmp.eq.s32.totalorder %s13, 0
    %p54 = por %p52, %p53
    %p55 = scmp.ne.s32.totalorder %s47, %s49
    %p56 = scmp.eq.s32.totalorder %s18, 1
    %p57 = por %p55, %p56
    %p58 = scmp.ne.s32.totalorder %s49, %s50
    %p59 = scmp.eq.s32.totalorder %s18, 0
    %p60 = por %p58, %p59
    %p61 = scmp.ne.s32.totalorder %s49, %s50
    %p62 = scmp.eq.s32.totalorder %s19, 1
    %p63 = por %p61, %p62
    %p65 = scmp.ne.s32.totalorder %s50, %s64
    %p66 = scmp.eq.s32.totalorder %s19, 0
    %p67 = por %p65, %p66
    %s69 = sadd.s32 %s68, 1
    %p72 = scmp.eq.s32.totalorder %s13, 1
    %p73 = scmp.ne.s32.totalorder %s68, %s70
    %p74 = scmp.eq.s32.totalorder %s13, 0
    %p75 = por %p73, %p74
    %p76 = scmp.ne.s32.totalorder %s68, %s70
    %p77 = scmp.eq.s32.totalorder %s18, 1
    %p78 = por %p76, %p77
    %p79 = scmp.ne.s32.totalorder %s70, %s71
    %p80 = scmp.eq.s32.totalorder %s18, 0
    %p81 = por %p79, %p80
    %p82 = scmp.ne.s32.totalorder %s70, %s71
    %p83 = scmp.eq.s32.totalorder %s19, 1
    %p84 = por %p82, %p83
    %p86 = scmp.ne.s32.totalorder %s71, %s85
    %p87 = scmp.eq.s32.totalorder %s19, 0
    %p88 = por %p86, %p87
    %s90 = sadd.s32 %s89, 1
    %p93 = scmp.eq.s32.totalorder %s13, 1
    %p94 = scmp.ne.s32.totalorder %s89, %s91
    %p95 = scmp.eq.s32.totalorder %s13, 0
    %p96 = por %p94, %p95
    %p97 = scmp.ne.s32.totalorder %s89, %s91
    %p98 = scmp.eq.s32.totalorder %s18, 1
    %p99 = por %p97, %p98
    %p100 = scmp.ne.s32.totalorder %s91, %s92
    %p101 = scmp.eq.s32.totalorder %s18, 0
    %p102 = por %p100, %p101
    %p103 = scmp.ne.s32.totalorder %s91, %s92
    %p104 = scmp.eq.s32.totalorder %s19, 1
    %p105 = por %p103, %p104
    %p107 = scmp.ne.s32.totalorder %s92, %s106
    %p108 = scmp.eq.s32.totalorder %s19, 0
    %p109 = por %p107, %p108
    %s111 = sadd.s32 %s110, 1
    %p114 = scmp.eq.s32.totalorder %s13, 1
    %p115 = scmp.ne.s32.totalorder %s110, %s112
    %p116 = scmp.eq.s32.totalorder %s13, 0
    %p117 = por %p115, %p116
    %p118 = scmp.ne.s32.totalorder %s110, %s112
    %p119 = scmp.eq.s32.totalorder %s18, 1
    %p120 = por %p118, %p119
    %p121 = scmp.ne.s32.totalorder %s112, %s113
    %p122 = scmp.eq.s32.totalorder %s18, 0
    %p123 = por %p121, %p122
    %p124 = scmp.ne.s32.totalorder %s112, %s113
    %p125 = scmp.eq.s32.totalorder %s19, 1
    %p126 = por %p124, %p125
    %p128 = scmp.ne.s32.totalorder %s113, %s127
    %p129 = scmp.eq.s32.totalorder %s19, 0
    %p130 = por %p128, %p129
    %s132 = sadd.s32 %s131, 1
    %p135 = scmp.eq.s32.totalorder %s13, 1
    %p136 = scmp.ne.s32.totalorder %s131, %s133
    %p137 = scmp.eq.s32.totalorder %s13, 0
    %p138 = por %p136, %p137
    %p139 = scmp.ne.s32.totalorder %s131, %s133
    %p140 = scmp.eq.s32.totalorder %s18, 1
    %p141 = por %p139, %p140
    %p142 = scmp.ne.s32.totalorder %s133, %s134
    %p143 = scmp.eq.s32.totalorder %s18, 0
    %p144 = por %p142, %p143
    %p145 = scmp.ne.s32.totalorder %s133, %s134
    %p146 = scmp.eq.s32.totalorder %s19, 1
    %p147 = por %p145, %p146
    %p149 = scmp.ne.s32.totalorder %s134, %s148
    %p150 = scmp.eq.s32.totalorder %s19, 0
    %p151 = por %p149, %p150
    %s153 = sadd.s32 %s152, 1
    %p156 = scmp.eq.s32.totalorder %s13, 1
    %p157 = scmp.ne.s32.totalorder %s152, %s154
    %p158 = scmp.eq.s32.totalorder %s13, 0
    %p159 = por %p157, %p158
    %p160 = scmp.ne.s32.totalorder %s152, %s154
    %p161 = scmp.eq.s32.totalorder %s18, 1
    %p162 = por %p160, %p161
    %p163 = scmp.ne.s32.totalorder %s154, %s155
    %p164 = scmp.eq.s32.totalorder %s18, 0
    %p165 = por %p163, %p164
    %p166 = scmp.ne.s32.totalorder %s154, %s155
    %p167 = scmp.eq.s32.totalorder %s19, 1
    %p168 = por %p166, %p167
    %p170 = scmp.ne.s32.totalorder %s155, %s169
    %p171 = scmp.eq.s32.totalorder %s19, 0
    %p172 = por %p170, %p171
    %s173 = ssub.s32 %s13, %s20
    %p174 = scmp.eq.s32.totalorder %s173, 0
    %s176 = sadd.s32 %s175, 1
    %s177 = scalar_select %p174, %s175, %s176
    %p180 = pneg %p174
    %p181 = scmp.eq.s32.totalorder %s13, 1
    %p182 = por %p180, %p181
    %p183 = scmp.ne.s32.totalorder %s175, %s178
    %p184 = scmp.eq.s32.totalorder %s13, 0
    %p185 = por %p183, %p184
    %p186 = scmp.ne.s32.totalorder %s175, %s178
    %p187 = scmp.eq.s32.totalorder %s18, 1
    %p188 = por %p186, %p187
    %p189 = scmp.ne.s32.totalorder %s178, %s179
    %p190 = scmp.eq.s32.totalorder %s18, 0
    %p191 = por %p189, %p190
    %p192 = scmp.ne.s32.totalorder %s178, %s179
    %p193 = scmp.eq.s32.totalorder %s19, 1
    %p194 = por %p192, %p193
    %p196 = scmp.ne.s32.totalorder %s179, %s195
    %p197 = scmp.eq.s32.totalorder %s19, 0
    %p198 = por %p196, %p197
    %p199 = scmp.le.s32.totalorder 1, %s13
    %p200 = scmp.lt.s32.totalorder %s13, 3
    %p201 = pnand %p199, %p200
    %p202 = pneg %p201
    // Predicated region
    $region9: #{residual_block.1} parent=5 // pred_check
      _
    $region10: #{residual_block.1} parent=5 // pred_check_branch
      %204 = sbr.rel (%p201) target = $region12
    $region11: #{residual_block.1} parent=5 // pred_region
      %s205 = ssub.s32 %s13, 1
      // Predicated region
      $region13: #{residual_block.1} parent=11 // pred_check
        %p206 = pneg %p60
      $region14: #{residual_block.1} parent=11 // pred_check_branch
        %208 = sbr.rel (%p206) target = $region16
      $region15: #{residual_block.1} parent=11 // pred_region
        _
      $region16: #{residual_block.1} parent=11 // pred_fallthru
        _
      // Predicated region
      $region17: #{residual_block.1} parent=11 // pred_check
        %p209 = pneg %p81
      $region18: #{residual_block.1} parent=11 // pred_check_branch
        %211 = sbr.rel (%p209) target = $region20
      $region19: #{residual_block.1} parent=11 // pred_region
        _
      $region20: #{residual_block.1} parent=11 // pred_fallthru
        _
      // Predicated region
      $region21: #{residual_block.1} parent=11 // pred_check
        %p212 = pneg %p102
      $region22: #{residual_block.1} parent=11 // pred_check_branch
        %214 = sbr.rel (%p212) target = $region24
      $region23: #{residual_block.1} parent=11 // pred_region
        _
      $region24: #{residual_block.1} parent=11 // pred_fallthru
        _
      // Predicated region
      $region25: #{residual_block.1} parent=11 // pred_check
        %p215 = pneg %p123
      $region26: #{residual_block.1} parent=11 // pred_check_branch
        %217 = sbr.rel (%p215) target = $region28
      $region27: #{residual_block.1} parent=11 // pred_region
        _
      $region28: #{residual_block.1} parent=11 // pred_fallthru
        _
      // Predicated region
      $region29: #{residual_block.1} parent=11 // pred_check
        %p218 = pneg %p144
      $region30: #{residual_block.1} parent=11 // pred_check_branch
        %220 = sbr.rel (%p218) target = $region32
      $region31: #{residual_block.1} parent=11 // pred_region
        _
      $region32: #{residual_block.1} parent=11 // pred_fallthru
        _
      // Predicated region
      $region33: #{residual_block.1} parent=11 // pred_check
        %p221 = pneg %p165
      $region34: #{residual_block.1} parent=11 // pred_check_branch
        %223 = sbr.rel (%p221) target = $region36
      $region35: #{residual_block.1} parent=11 // pred_region
        _
      $region36: #{residual_block.1} parent=11 // pred_fallthru
        _
    $region12: #{residual_block.1} parent=5 // pred_fallthru
      _
    %p224 = scmp.lt.s32.totalorder %s13, 2
    // Predicated region
    $region37: #{residual_block.1} parent=5 // pred_check
      %p225 = pneg %p224
    $region38: #{residual_block.1} parent=5 // pred_check_branch
      %227 = sbr.rel (%p225) target = $region40
    $region39: #{residual_block.1} parent=5 // pred_region
      // Predicated region
      $region41: #{residual_block.1} parent=39 // pred_check
        %p228 = pneg %p33
      $region42: #{residual_block.1} parent=39 // pred_check_branch
        %230 = sbr.rel (%p228) target = $region44
      $region43: #{residual_block.1} parent=39 // pred_region
        %p231 = scmp.lt.s32.totalorder %s13, 1
        %s232 = scalar_select %p231, %s13, 1
        %s233 = smul.addr %s232, 8
        %s234 = scalar_lea.vmem %s0, %s233
      $region44: #{residual_block.1} parent=39 // pred_fallthru
        _
    $region40: #{residual_block.1} parent=5 // pred_fallthru
      _
    %p235 = scmp.le.s32.totalorder 1, %s13
    %p236 = scmp.lt.s32.totalorder %s13, 3
    %p237 = pnand %p235, %p236
    %p238 = pneg %p237
    // Predicated region
    $region45: #{residual_block.1} parent=5 // pred_check
      _
    $region46: #{residual_block.1} parent=5 // pred_check_branch
      %240 = sbr.rel (%p237) target = $region48
    $region47: #{residual_block.1} parent=5 // pred_region
      %s241 = ssub.s32 %s13, 1
      %p242 = scmp.lt.s32.totalorder %s18, 1
      %s243 = scalar_select %p242, %s18, 1
      %s244 = smul.addr %s243, 8
      %s245 = scalar_lea.vmem %s0, %s244
      %p246 = pneg %p39
      %p247 = pneg %p36
      %p248 = pneg %p60
      %p249 = pneg %p57
      %p250 = pneg %p81
      %p251 = pneg %p78
      %p252 = pneg %p102
      %p253 = pneg %p99
      %p254 = pneg %p123
      %p255 = pneg %p120
      %p256 = pneg %p144
      %p257 = pneg %p141
      %p258 = pneg %p165
      %p259 = pneg %p162
      %p260 = pneg %p191
      %p261 = pneg %p188
      %p262 = scmp.lt.s32.totalorder %s18, 1
      %s263 = scalar_select %p262, %s18, 1
      %s264 = smul.addr %s263, 8
      %s265 = scalar_lea.vmem %s7, %s264
      %p266 = scmp.lt.s32.totalorder %s18, 1
      %s267 = scalar_select %p266, %s18, 1
      %s268 = smul.addr %s267, 8
      %s269 = scalar_lea.vmem %s0, %s268
      %p270 = scmp.lt.s32.totalorder %s18, 1
      %s271 = scalar_select %p270, %s18, 1
      %s272 = smul.addr %s271, 8
      %s273 = scalar_lea.vmem %s7, %s272
      %v274 = vld [vmem:[%s269] sm:$0xff]
      %v275 = vld [vmem:[%s5] sm:$0xff]
      %v276 = vld [vmem:[%s6] sm:$0xff]
      %v277 = vld [vmem:[%s1] sm:$0xff]
      %v278 = vld [vmem:[%s1 + $0x8] sm:$0xff]
      %v279 = vld [vmem:[%s1 + $0x10] sm:$0xff]
      %v280 = vld [vmem:[%s1 + $0x18] sm:$0xff]
      %v281 = vld [vmem:[%s1 + $0x20] sm:$0xff]
      %v282 = vld [vmem:[%s1 + $0x28] sm:$0xff]
      %v283 = vld [vmem:[%s1 + $0x30] sm:$0xff]
      %v284 = vld [vmem:[%s1 + $0x38] sm:$0xff]
      %v285 = vld [vmem:[%s1 + $0x40] sm:$0xff]
      %v286 = vld [vmem:[%s1 + $0x48] sm:$0xff]
      %v287 = vld [vmem:[%s1 + $0x50] sm:$0xff]
      %v288 = vld [vmem:[%s1 + $0x58] sm:$0xff]
      %v289 = vld [vmem:[%s1 + $0x60] sm:$0xff]
      %v290 = vld [vmem:[%s1 + $0x68] sm:$0xff]
      %v291 = vld [vmem:[%s1 + $0x70] sm:$0xff]
      %v292 = vld [vmem:[%s1 + $0x78] sm:$0xff]
      %293 = vmatprep.subr.mxu0 0.0
      %294 = vmatpush1.msra.mxu0 %v292
      %295 = vmatprep.subr.mxu0 0.0
      %296 = vmatpush1.msra.mxu0 %v291
      %297 = vmatprep.subr.mxu0 0.0
      %298 = vmatpush1.msra.mxu0 %v290
      %299 = vmatprep.subr.mxu0 0.0
      %300 = vmatpush1.msra.mxu0 %v289
      %301 = vmatprep.subr.mxu0 0.0
      %302 = vmatpush1.msra.mxu0 %v288
      %303 = vmatprep.subr.mxu0 0.0
      %304 = vmatpush1.msra.mxu0 %v287
      %305 = vmatprep.subr.mxu0 0.0
      %306 = vmatpush1.msra.mxu0 %v286
      %307 = vmatprep.subr.mxu0 0.0
      %308 = vmatpush1.msra.mxu0 %v285
      %309 = vmatprep.subr.mxu0 0.0
      %310 = vmatpush1.msra.mxu0 %v284
      %311 = vmatprep.subr.mxu0 0.0
      %312 = vmatpush1.msra.mxu0 %v283
      %313 = vmatprep.subr.mxu0 0.0
      %314 = vmatpush1.msra.mxu0 %v282
      %315 = vmatprep.subr.mxu0 0.0
      %316 = vmatpush1.msra.mxu0 %v281
      %317 = vmatprep.subr.mxu0 0.0
      %318 = vmatpush1.msra.mxu0 %v280
      %319 = vmatprep.subr.mxu0 0.0
      %320 = vmatpush1.msra.mxu0 %v279
      %321 = vmatprep.subr.mxu0 0.0
      %322 = vmatpush1.msra.mxu0 %v278
      %323 = vmatprep.subr.mxu0 0.0
      %324 = vmatpush1.msra.mxu0 %v277
      %325 = vmatprep.subr.mxu0 0.0
      %326 = vmatpush2.msra.mxu0 0.0
      %327 = vmatprep.subr.mxu0 0.0
      %328 = vmatpush2.msra.mxu0 0.0
      %329 = vmatprep.subr.mxu0 0.0
      %330 = vmatpush2.msra.mxu0 0.0
      %331 = vmatprep.subr.mxu0 0.0
      %332 = vmatpush2.msra.mxu0 0.0
      %333 = vmatprep.subr.mxu0 0.0
      %334 = vmatpush2.msra.mxu0 0.0
      %335 = vmatprep.subr.mxu0 0.0
      %336 = vmatpush2.msra.mxu0 0.0
      %337 = vmatprep.subr.mxu0 0.0
      %338 = vmatpush2.msra.mxu0 0.0
      %339 = vmatprep.subr.mxu0 0.0
      %340 = vmatpush2.msra.mxu0 0.0
      %341 = vmatprep.subr.mxu0 0.0
      %342 = vmatpush2.msra.mxu0 0.0
      %343 = vmatprep.subr.mxu0 0.0
      %344 = vmatpush2.msra.mxu0 0.0
      %345 = vmatprep.subr.mxu0 0.0
      %346 = vmatpush2.msra.mxu0 0.0
      %347 = vmatprep.subr.mxu0 0.0
      %348 = vmatpush2.msra.mxu0 0.0
      %349 = vmatprep.subr.mxu0 0.0
      %350 = vmatpush2.msra.mxu0 0.0
      %351 = vmatprep.subr.mxu0 0.0
      %352 = vmatpush2.msra.mxu0 0.0
      %353 = vmatprep.subr.mxu0 0.0
      %354 = vmatpush2.msra.mxu0 0.0
      %355 = vmatprep.subr.mxu0 0.0
      %356 = vmatpush2.msra.mxu0 0.0
      %357 = vmatprep.mubr.f32.mxu0 0.0
      %358 = vmatmul.mubr.f32.gmra.mxu0 %v274
      %v359 = vpop.f32.mrf.mxu0
      %v360 = vadd.f32 0.0, %v359
      %v361 = vpop.f32.mrf.mxu0
      %362 = vdwg.mxu0
      %s363 = scalar_lea.vmem %s1, 128
      %v364 = vld [vmem:[%s363] sm:$0xff]
      %v365 = vld [vmem:[%s363 + $0x8] sm:$0xff]
      %v366 = vld [vmem:[%s363 + $0x10] sm:$0xff]
      %v367 = vld [vmem:[%s363 + $0x18] sm:$0xff]
      %v368 = vld [vmem:[%s363 + $0x20] sm:$0xff]
      %v369 = vld [vmem:[%s363 + $0x28] sm:$0xff]
      %v370 = vld [vmem:[%s363 + $0x30] sm:$0xff]
      %v371 = vld [vmem:[%s363 + $0x38] sm:$0xff]
      %v372 = vld [vmem:[%s363 + $0x40] sm:$0xff]
      %v373 = vld [vmem:[%s363 + $0x48] sm:$0xff]
      %v374 = vld [vmem:[%s363 + $0x50] sm:$0xff]
      %v375 = vld [vmem:[%s363 + $0x58] sm:$0xff]
      %v376 = vld [vmem:[%s363 + $0x60] sm:$0xff]
      %v377 = vld [vmem:[%s363 + $0x68] sm:$0xff]
      %v378 = vld [vmem:[%s363 + $0x70] sm:$0xff]
      %v379 = vld [vmem:[%s363 + $0x78] sm:$0xff]
      %380 = vmatprep.subr.mxu0 0.0
      %381 = vmatpush1.msra.mxu0 %v379
      %382 = vmatprep.subr.mxu0 0.0
      %383 = vmatpush1.msra.mxu0 %v378
      %384 = vmatprep.subr.mxu0 0.0
      %385 = vmatpush1.msra.mxu0 %v377
      %386 = vmatprep.subr.mxu0 0.0
      %387 = vmatpush1.msra.mxu0 %v376
      %388 = vmatprep.subr.mxu0 0.0
      %389 = vmatpush1.msra.mxu0 %v375
      %390 = vmatprep.subr.mxu0 0.0
      %391 = vmatpush1.msra.mxu0 %v374
      %392 = vmatprep.subr.mxu0 0.0
      %393 = vmatpush1.msra.mxu0 %v373
      %394 = vmatprep.subr.mxu0 0.0
      %395 = vmatpush1.msra.mxu0 %v372
      %396 = vmatprep.subr.mxu0 0.0
      %397 = vmatpush1.msra.mxu0 %v371
      %398 = vmatprep.subr.mxu0 0.0
      %399 = vmatpush1.msra.mxu0 %v370
      %400 = vmatprep.subr.mxu0 0.0
      %401 = vmatpush1.msra.mxu0 %v369
      %402 = vmatprep.subr.mxu0 0.0
      %403 = vmatpush1.msra.mxu0 %v368
      %404 = vmatprep.subr.mxu0 0.0
      %405 = vmatpush1.msra.mxu0 %v367
      %406 = vmatprep.subr.mxu0 0.0
      %407 = vmatpush1.msra.mxu0 %v366
      %408 = vmatprep.subr.mxu0 0.0
      %409 = vmatpush1.msra.mxu0 %v365
      %410 = vmatprep.subr.mxu0 0.0
      %411 = vmatpush1.msra.mxu0 %v364
      %412 = vmatprep.subr.mxu0 0.0
      %413 = vmatpush2.msra.mxu0 0.0
      %414 = vmatprep.subr.mxu0 0.0
      %415 = vmatpush2.msra.mxu0 0.0
      %416 = vmatprep.subr.mxu0 0.0
      %417 = vmatpush2.msra.mxu0 0.0
      %418 = vmatprep.subr.mxu0 0.0
      %419 = vmatpush2.msra.mxu0 0.0
      %420 = vmatprep.subr.mxu0 0.0
      %421 = vmatpush2.msra.mxu0 0.0
      %422 = vmatprep.subr.mxu0 0.0
      %423 = vmatpush2.msra.mxu0 0.0
      %424 = vmatprep.subr.mxu0 0.0
      %425 = vmatpush2.msra.mxu0 0.0
      %426 = vmatprep.subr.mxu0 0.0
      %427 = vmatpush2.msra.mxu0 0.0
      %428 = vmatprep.subr.mxu0 0.0
      %429 = vmatpush2.msra.mxu0 0.0
      %430 = vmatprep.subr.mxu0 0.0
      %431 = vmatpush2.msra.mxu0 0.0
      %432 = vmatprep.subr.mxu0 0.0
      %433 = vmatpush2.msra.mxu0 0.0
      %434 = vmatprep.subr.mxu0 0.0
      %435 = vmatpush2.msra.mxu0 0.0
      %436 = vmatprep.subr.mxu0 0.0
      %437 = vmatpush2.msra.mxu0 0.0
      %438 = vmatprep.subr.mxu0 0.0
      %439 = vmatpush2.msra.mxu0 0.0
      %440 = vmatprep.subr.mxu0 0.0
      %441 = vmatpush2.msra.mxu0 0.0
      %442 = vmatprep.subr.mxu0 0.0
      %443 = vmatpush2.msra.mxu0 0.0
      %444 = vmatprep.mubr.f32.mxu0 0.0
      %445 = vmatmul.mubr.f32.gmra.mxu0 %v274
      %v446 = vpop.f32.mrf.mxu0
      %v447 = vadd.f32 0.0, %v446
      %v448 = vpop.f32.mrf.mxu0
      %449 = vdwg.mxu0
      %s450 = scalar_lea.vmem %s1, 256
      %v451 = vld [vmem:[%s450] sm:$0xff]
      %v452 = vld [vmem:[%s450 + $0x8] sm:$0xff]
      %v453 = vld [vmem:[%s450 + $0x10] sm:$0xff]
      %v454 = vld [vmem:[%s450 + $0x18] sm:$0xff]
      %v455 = vld [vmem:[%s450 + $0x20] sm:$0xff]
      %v456 = vld [vmem:[%s450 + $0x28] sm:$0xff]
      %v457 = vld [vmem:[%s450 + $0x30] sm:$0xff]
      %v458 = vld [vmem:[%s450 + $0x38] sm:$0xff]
      %v459 = vld [vmem:[%s450 + $0x40] sm:$0xff]
      %v460 = vld [vmem:[%s450 + $0x48] sm:$0xff]
      %v461 = vld [vmem:[%s450 + $0x50] sm:$0xff]
      %v462 = vld [vmem:[%s450 + $0x58] sm:$0xff]
      %v463 = vld [vmem:[%s450 + $0x60] sm:$0xff]
      %v464 = vld [vmem:[%s450 + $0x68] sm:$0xff]
      %v465 = vld [vmem:[%s450 + $0x70] sm:$0xff]
      %v466 = vld [vmem:[%s450 + $0x78] sm:$0xff]
      %467 = vmatprep.subr.mxu0 0.0
      %468 = vmatpush1.msra.mxu0 %v466
      %469 = vmatprep.subr.mxu0 0.0
      %470 = vmatpush1.msra.mxu0 %v465
      %471 = vmatprep.subr.mxu0 0.0
      %472 = vmatpush1.msra.mxu0 %v464
      %473 = vmatprep.subr.mxu0 0.0
      %474 = vmatpush1.msra.mxu0 %v463
      %475 = vmatprep.subr.mxu0 0.0
      %476 = vmatpush1.msra.mxu0 %v462
      %477 = vmatprep.subr.mxu0 0.0
      %478 = vmatpush1.msra.mxu0 %v461
      %479 = vmatprep.subr.mxu0 0.0
      %480 = vmatpush1.msra.mxu0 %v460
      %481 = vmatprep.subr.mxu0 0.0
      %482 = vmatpush1.msra.mxu0 %v459
      %483 = vmatprep.subr.mxu0 0.0
      %484 = vmatpush1.msra.mxu0 %v458
      %485 = vmatprep.subr.mxu0 0.0
      %486 = vmatpush1.msra.mxu0 %v457
      %487 = vmatprep.subr.mxu0 0.0
      %488 = vmatpush1.msra.mxu0 %v456
      %489 = vmatprep.subr.mxu0 0.0
      %490 = vmatpush1.msra.mxu0 %v455
      %491 = vmatprep.subr.mxu0 0.0
      %492 = vmatpush1.msra.mxu0 %v454
      %493 = vmatprep.subr.mxu0 0.0
      %494 = vmatpush1.msra.mxu0 %v453
      %495 = vmatprep.subr.mxu0 0.0
      %496 = vmatpush1.msra.mxu0 %v452
      %497 = vmatprep.subr.mxu0 0.0
      %498 = vmatpush1.msra.mxu0 %v451
      %499 = vmatprep.subr.mxu0 0.0
      %500 = vmatpush2.msra.mxu0 0.0
      %501 = vmatprep.subr.mxu0 0.0
      %502 = vmatpush2.msra.mxu0 0.0
      %503 = vmatprep.subr.mxu0 0.0
      %504 = vmatpush2.msra.mxu0 0.0
      %505 = vmatprep.subr.mxu0 0.0
      %506 = vmatpush2.msra.mxu0 0.0
      %507 = vmatprep.subr.mxu0 0.0
      %508 = vmatpush2.msra.mxu0 0.0
      %509 = vmatprep.subr.mxu0 0.0
      %510 = vmatpush2.msra.mxu0 0.0
      %511 = vmatprep.subr.mxu0 0.0
      %512 = vmatpush2.msra.mxu0 0.0
      %513 = vmatprep.subr.mxu0 0.0
      %514 = vmatpush2.msra.mxu0 0.0
      %515 = vmatprep.subr.mxu0 0.0
      %516 = vmatpush2.msra.mxu0 0.0
      %517 = vmatprep.subr.mxu0 0.0
      %518 = vmatpush2.msra.mxu0 0.0
      %519 = vmatprep.subr.mxu0 0.0
      %520 = vmatpush2.msra.mxu0 0.0
      %521 = vmatprep.subr.mxu0 0.0
      %522 = vmatpush2.msra.mxu0 0.0
      %523 = vmatprep.subr.mxu0 0.0
      %524 = vmatpush2.msra.mxu0 0.0
      %525 = vmatprep.subr.mxu0 0.0
      %526 = vmatpush2.msra.mxu0 0.0
      %527 = vmatprep.subr.mxu0 0.0
      %528 = vmatpush2.msra.mxu0 0.0
      %529 = vmatprep.subr.mxu0 0.0
      %530 = vmatpush2.msra.mxu0 0.0
      %531 = vmatprep.mubr.f32.mxu0 0.0
      %532 = vmatmul.mubr.f32.gmra.mxu0 %v274
      %v533 = vpop.f32.mrf.mxu0
      %v534 = vadd.f32 0.0, %v533
      %v535 = vpop.f32.mrf.mxu0
      %536 = vdwg.mxu0
      %v537 = vrot.slane %v360, 7
      %539 = vset.pattern.permute.xlu0 0
      %540 = vperm.xlu0 %539, %v275
      %v541 = vpop.permute.xlu0 %540
      %v543 = vmul.f32 %v537, %v541
      %v544 = vrot.slane %v534, 1
      %546 = vset.pattern.permute.xlu0 0
      %547 = vperm.xlu0 %546, %v276
      %v548 = vpop.permute.xlu0 %547
      %v550 = vmul.f32 %v544, %v548
      %v551 = vadd.f32 %v543, %v447
      %v552 = vadd.f32 %v551, %v550
      %v553 = vld [vmem:[%s2] sm:$0x1]
      %v555 = vlaneseq
      %v556 = vshrl.u32 %v555, 7
      %v557 = vsub.s32 0, %v556
      %v558 = vrot.slane %v553, %v557
      %v560 = vadd.f32 %v552, %v558
      %v561 = vmax.f32 %v560, 0.0
      %v562 = vld [vmem:[%s3] sm:$0xff]
      %v563 = vld [vmem:[%s3 + $0x8] sm:$0xff]
      %v564 = vld [vmem:[%s3 + $0x10] sm:$0xff]
      %v565 = vld [vmem:[%s3 + $0x18] sm:$0xff]
      %v566 = vld [vmem:[%s3 + $0x20] sm:$0xff]
      %v567 = vld [vmem:[%s3 + $0x28] sm:$0xff]
      %v568 = vld [vmem:[%s3 + $0x30] sm:$0xff]
      %v569 = vld [vmem:[%s3 + $0x38] sm:$0xff]
      %v570 = vld [vmem:[%s3 + $0x40] sm:$0xff]
      %v571 = vld [vmem:[%s3 + $0x48] sm:$0xff]
      %v572 = vld [vmem:[%s3 + $0x50] sm:$0xff]
      %v573 = vld [vmem:[%s3 + $0x58] sm:$0xff]
      %v574 = vld [vmem:[%s3 + $0x60] sm:$0xff]
      %v575 = vld [vmem:[%s3 + $0x68] sm:$0xff]
      %v576 = vld [vmem:[%s3 + $0x70] sm:$0xff]
      %v577 = vld [vmem:[%s3 + $0x78] sm:$0xff]
      %578 = vmatprep.subr.mxu0 0.0
      %579 = vmatpush1.msra.mxu0 %v577
      %580 = vmatprep.subr.mxu0 0.0
      %581 = vmatpush1.msra.mxu0 %v576
      %582 = vmatprep.subr.mxu0 0.0
      %583 = vmatpush1.msra.mxu0 %v575
      %584 = vmatprep.subr.mxu0 0.0
      %585 = vmatpush1.msra.mxu0 %v574
      %586 = vmatprep.subr.mxu0 0.0
      %587 = vmatpush1.msra.mxu0 %v573
      %588 = vmatprep.subr.mxu0 0.0
      %589 = vmatpush1.msra.mxu0 %v572
      %590 = vmatprep.subr.mxu0 0.0
      %591 = vmatpush1.msra.mxu0 %v571
      %592 = vmatprep.subr.mxu0 0.0
      %593 = vmatpush1.msra.mxu0 %v570
      %594 = vmatprep.subr.mxu0 0.0
      %595 = vmatpush1.msra.mxu0 %v569
      %596 = vmatprep.subr.mxu0 0.0
      %597 = vmatpush1.msra.mxu0 %v568
      %598 = vmatprep.subr.mxu0 0.0
      %599 = vmatpush1.msra.mxu0 %v567
      %600 = vmatprep.subr.mxu0 0.0
      %601 = vmatpush1.msra.mxu0 %v566
      %602 = vmatprep.subr.mxu0 0.0
      %603 = vmatpush1.msra.mxu0 %v565
      %604 = vmatprep.subr.mxu0 0.0
      %605 = vmatpush1.msra.mxu0 %v564
      %606 = vmatprep.subr.mxu0 0.0
      %607 = vmatpush1.msra.mxu0 %v563
      %608 = vmatprep.subr.mxu0 0.0
      %609 = vmatpush1.msra.mxu0 %v562
      %610 = vmatprep.subr.mxu0 0.0
      %611 = vmatpush2.msra.mxu0 0.0
      %612 = vmatprep.subr.mxu0 0.0
      %613 = vmatpush2.msra.mxu0 0.0
      %614 = vmatprep.subr.mxu0 0.0
      %615 = vmatpush2.msra.mxu0 0.0
      %616 = vmatprep.subr.mxu0 0.0
      %617 = vmatpush2.msra.mxu0 0.0
      %618 = vmatprep.subr.mxu0 0.0
      %619 = vmatpush2.msra.mxu0 0.0
      %620 = vmatprep.subr.mxu0 0.0
      %621 = vmatpush2.msra.mxu0 0.0
      %622 = vmatprep.subr.mxu0 0.0
      %623 = vmatpush2.msra.mxu0 0.0
      %624 = vmatprep.subr.mxu0 0.0
      %625 = vmatpush2.msra.mxu0 0.0
      %626 = vmatprep.subr.mxu0 0.0
      %627 = vmatpush2.msra.mxu0 0.0
      %628 = vmatprep.subr.mxu0 0.0
      %629 = vmatpush2.msra.mxu0 0.0
      %630 = vmatprep.subr.mxu0 0.0
      %631 = vmatpush2.msra.mxu0 0.0
      %632 = vmatprep.subr.mxu0 0.0
      %633 = vmatpush2.msra.mxu0 0.0
      %634 = vmatprep.subr.mxu0 0.0
      %635 = vmatpush2.msra.mxu0 0.0
      %636 = vmatprep.subr.mxu0 0.0
      %637 = vmatpush2.msra.mxu0 0.0
      %638 = vmatprep.subr.mxu0 0.0
      %639 = vmatpush2.msra.mxu0 0.0
      %640 = vmatprep.subr.mxu0 0.0
      %641 = vmatpush2.msra.mxu0 0.0
      %642 = vmatprep.mubr.f32.mxu0 0.0
      %643 = vmatmul.mubr.f32.gmra.mxu0 %v561
      %v644 = vpop.f32.mrf.mxu0
      %v645 = vadd.f32 0.0, %v644
      %v646 = vpop.f32.mrf.mxu0
      %647 = vdwg.mxu0
      %s648 = scalar_lea.vmem %s3, 128
      %v649 = vld [vmem:[%s648] sm:$0xff]
      %v650 = vld [vmem:[%s648 + $0x8] sm:$0xff]
      %v651 = vld [vmem:[%s648 + $0x10] sm:$0xff]
      %v652 = vld [vmem:[%s648 + $0x18] sm:$0xff]
      %v653 = vld [vmem:[%s648 + $0x20] sm:$0xff]
      %v654 = vld [vmem:[%s648 + $0x28] sm:$0xff]
      %v655 = vld [vmem:[%s648 + $0x30] sm:$0xff]
      %v656 = vld [vmem:[%s648 + $0x38] sm:$0xff]
      %v657 = vld [vmem:[%s648 + $0x40] sm:$0xff]
      %v658 = vld [vmem:[%s648 + $0x48] sm:$0xff]
      %v659 = vld [vmem:[%s648 + $0x50] sm:$0xff]
      %v660 = vld [vmem:[%s648 + $0x58] sm:$0xff]
      %v661 = vld [vmem:[%s648 + $0x60] sm:$0xff]
      %v662 = vld [vmem:[%s648 + $0x68] sm:$0xff]
      %v663 = vld [vmem:[%s648 + $0x70] sm:$0xff]
      %v664 = vld [vmem:[%s648 + $0x78] sm:$0xff]
      %665 = vmatprep.subr.mxu0 0.0
      %666 = vmatpush1.msra.mxu0 %v664
      %667 = vmatprep.subr.mxu0 0.0
      %668 = vmatpush1.msra.mxu0 %v663
      %669 = vmatprep.subr.mxu0 0.0
      %670 = vmatpush1.msra.mxu0 %v662
      %671 = vmatprep.subr.mxu0 0.0
      %672 = vmatpush1.msra.mxu0 %v661
      %673 = vmatprep.subr.mxu0 0.0
      %674 = vmatpush1.msra.mxu0 %v660
      %675 = vmatprep.subr.mxu0 0.0
      %676 = vmatpush1.msra.mxu0 %v659
      %677 = vmatprep.subr.mxu0 0.0
      %678 = vmatpush1.msra.mxu0 %v658
      %679 = vmatprep.subr.mxu0 0.0
      %680 = vmatpush1.msra.mxu0 %v657
      %681 = vmatprep.subr.mxu0 0.0
      %682 = vmatpush1.msra.mxu0 %v656
      %683 = vmatprep.subr.mxu0 0.0
      %684 = vmatpush1.msra.mxu0 %v655
      %685 = vmatprep.subr.mxu0 0.0
      %686 = vmatpush1.msra.mxu0 %v654
      %687 = vmatprep.subr.mxu0 0.0
      %688 = vmatpush1.msra.mxu0 %v653
      %689 = vmatprep.subr.mxu0 0.0
      %690 = vmatpush1.msra.mxu0 %v652
      %691 = vmatprep.subr.mxu0 0.0
      %692 = vmatpush1.msra.mxu0 %v651
      %693 = vmatprep.subr.mxu0 0.0
      %694 = vmatpush1.msra.mxu0 %v650
      %695 = vmatprep.subr.mxu0 0.0
      %696 = vmatpush1.msra.mxu0 %v649
      %697 = vmatprep.subr.mxu0 0.0
      %698 = vmatpush2.msra.mxu0 0.0
      %699 = vmatprep.subr.mxu0 0.0
      %700 = vmatpush2.msra.mxu0 0.0
      %701 = vmatprep.subr.mxu0 0.0
      %702 = vmatpush2.msra.mxu0 0.0
      %703 = vmatprep.subr.mxu0 0.0
      %704 = vmatpush2.msra.mxu0 0.0
      %705 = vmatprep.subr.mxu0 0.0
      %706 = vmatpush2.msra.mxu0 0.0
      %707 = vmatprep.subr.mxu0 0.0
      %708 = vmatpush2.msra.mxu0 0.0
      %709 = vmatprep.subr.mxu0 0.0
      %710 = vmatpush2.msra.mxu0 0.0
      %711 = vmatprep.subr.mxu0 0.0
      %712 = vmatpush2.msra.mxu0 0.0
      %713 = vmatprep.subr.mxu0 0.0
      %714 = vmatpush2.msra.mxu0 0.0
      %715 = vmatprep.subr.mxu0 0.0
      %716 = vmatpush2.msra.mxu0 0.0
      %717 = vmatprep.subr.mxu0 0.0
      %718 = vmatpush2.msra.mxu0 0.0
      %719 = vmatprep.subr.mxu0 0.0
      %720 = vmatpush2.msra.mxu0 0.0
      %721 = vmatprep.subr.mxu0 0.0
      %722 = vmatpush2.msra.mxu0 0.0
      %723 = vmatprep.subr.mxu0 0.0
      %724 = vmatpush2.msra.mxu0 0.0
      %725 = vmatprep.subr.mxu0 0.0
      %726 = vmatpush2.msra.mxu0 0.0
      %727 = vmatprep.subr.mxu0 0.0
      %728 = vmatpush2.msra.mxu0 0.0
      %729 = vmatprep.mubr.f32.mxu0 0.0
      %730 = vmatmul.mubr.f32.gmra.mxu0 %v561
      %v731 = vpop.f32.mrf.mxu0
      %v732 = vadd.f32 0.0, %v731
      %v733 = vpop.f32.mrf.mxu0
      %734 = vdwg.mxu0
      %s735 = scalar_lea.vmem %s3, 256
      %v736 = vld [vmem:[%s735] sm:$0xff]
      %v737 = vld [vmem:[%s735 + $0x8] sm:$0xff]
      %v738 = vld [vmem:[%s735 + $0x10] sm:$0xff]
      %v739 = vld [vmem:[%s735 + $0x18] sm:$0xff]
      %v740 = vld [vmem:[%s735 + $0x20] sm:$0xff]
      %v741 = vld [vmem:[%s735 + $0x28] sm:$0xff]
      %v742 = vld [vmem:[%s735 + $0x30] sm:$0xff]
      %v743 = vld [vmem:[%s735 + $0x38] sm:$0xff]
      %v744 = vld [vmem:[%s735 + $0x40] sm:$0xff]
      %v745 = vld [vmem:[%s735 + $0x48] sm:$0xff]
      %v746 = vld [vmem:[%s735 + $0x50] sm:$0xff]
      %v747 = vld [vmem:[%s735 + $0x58] sm:$0xff]
      %v748 = vld [vmem:[%s735 + $0x60] sm:$0xff]
      %v749 = vld [vmem:[%s735 + $0x68] sm:$0xff]
      %v750 = vld [vmem:[%s735 + $0x70] sm:$0xff]
      %v751 = vld [vmem:[%s735 + $0x78] sm:$0xff]
      %752 = vmatprep.subr.mxu0 0.0
      %753 = vmatpush1.msra.mxu0 %v751
      %754 = vmatprep.subr.mxu0 0.0
      %755 = vmatpush1.msra.mxu0 %v750
      %756 = vmatprep.subr.mxu0 0.0
      %757 = vmatpush1.msra.mxu0 %v749
      %758 = vmatprep.subr.mxu0 0.0
      %759 = vmatpush1.msra.mxu0 %v748
      %760 = vmatprep.subr.mxu0 0.0
      %761 = vmatpush1.msra.mxu0 %v747
      %762 = vmatprep.subr.mxu0 0.0
      %763 = vmatpush1.msra.mxu0 %v746
      %764 = vmatprep.subr.mxu0 0.0
      %765 = vmatpush1.msra.mxu0 %v745
      %766 = vmatprep.subr.mxu0 0.0
      %767 = vmatpush1.msra.mxu0 %v744
      %768 = vmatprep.subr.mxu0 0.0
      %769 = vmatpush1.msra.mxu0 %v743
      %770 = vmatprep.subr.mxu0 0.0
      %771 = vmatpush1.msra.mxu0 %v742
      %772 = vmatprep.subr.mxu0 0.0
      %773 = vmatpush1.msra.mxu0 %v741
      %774 = vmatprep.subr.mxu0 0.0
      %775 = vmatpush1.msra.mxu0 %v740
      %776 = vmatprep.subr.mxu0 0.0
      %777 = vmatpush1.msra.mxu0 %v739
      %778 = vmatprep.subr.mxu0 0.0
      %779 = vmatpush1.msra.mxu0 %v738
      %780 = vmatprep.subr.mxu0 0.0
      %781 = vmatpush1.msra.mxu0 %v737
      %782 = vmatprep.subr.mxu0 0.0
      %783 = vmatpush1.msra.mxu0 %v736
      %784 = vmatprep.subr.mxu0 0.0
      %785 = vmatpush2.msra.mxu0 0.0
      %786 = vmatprep.subr.mxu0 0.0
      %787 = vmatpush2.msra.mxu0 0.0
      %788 = vmatprep.subr.mxu0 0.0
      %789 = vmatpush2.msra.mxu0 0.0
      %790 = vmatprep.subr.mxu0 0.0
      %791 = vmatpush2.msra.mxu0 0.0
      %792 = vmatprep.subr.mxu0 0.0
      %793 = vmatpush2.msra.mxu0 0.0
      %794 = vmatprep.subr.mxu0 0.0
      %795 = vmatpush2.msra.mxu0 0.0
      %796 = vmatprep.subr.mxu0 0.0
      %797 = vmatpush2.msra.mxu0 0.0
      %798 = vmatprep.subr.mxu0 0.0
      %799 = vmatpush2.msra.mxu0 0.0
      %800 = vmatprep.subr.mxu0 0.0
      %801 = vmatpush2.msra.mxu0 0.0
      %802 = vmatprep.subr.mxu0 0.0
      %803 = vmatpush2.msra.mxu0 0.0
      %804 = vmatprep.subr.mxu0 0.0
      %805 = vmatpush2.msra.mxu0 0.0
      %806 = vmatprep.subr.mxu0 0.0
      %807 = vmatpush2.msra.mxu0 0.0
      %808 = vmatprep.subr.mxu0 0.0
      %809 = vmatpush2.msra.mxu0 0.0
      %810 = vmatprep.subr.mxu0 0.0
      %811 = vmatpush2.msra.mxu0 0.0
      %812 = vmatprep.subr.mxu0 0.0
      %813 = vmatpush2.msra.mxu0 0.0
      %814 = vmatprep.subr.mxu0 0.0
      %815 = vmatpush2.msra.mxu0 0.0
      %816 = vmatprep.mubr.f32.mxu0 0.0
      %817 = vmatmul.mubr.f32.gmra.mxu0 %v561
      %v818 = vpop.f32.mrf.mxu0
      %v819 = vadd.f32 0.0, %v818
      %v820 = vpop.f32.mrf.mxu0
      %821 = vdwg.mxu0
      %v822 = vrot.slane %v645, 7
      %v823 = vmul.f32 %v822, %v541
      %v824 = vrot.slane %v819, 1
      %v825 = vmul.f32 %v824, %v548
      %v826 = vadd.f32 %v823, %v732
      %v827 = vadd.f32 %v826, %v825
      %v828 = vld [vmem:[%s4] sm:$0x1]
      %v830 = vlaneseq
      %v831 = vshrl.u32 %v830, 7
      %v832 = vsub.s32 0, %v831
      %v833 = vrot.slane %v828, %v832
      %v835 = vadd.f32 %v827, %v833
      %v836 = vmul.f32 %v835, 0.5
      %v837 = vadd.f32 %v836, %v274
      %838 = vst [vmem:[%s273] sm:$0xff] %v837
      %p839 = scmp.lt.s32.totalorder %s18, 1
      %s840 = scalar_select %p839, %s18, 1
      %s841 = smul.addr %s840, 8
      %s842 = scalar_lea.vmem %s7, %s841
      // Predicated region
      $region49: #{residual_block.1} parent=47 // pred_check
        %p843 = pneg %p188
      $region50: #{residual_block.1} parent=47 // pred_check_branch
        %845 = sbr.rel (%p843) target = $region52
      $region51: #{residual_block.1} parent=47 // pred_region
        _
      $region52: #{residual_block.1} parent=47 // pred_fallthru
        _
    $region48: #{residual_block.1} parent=5 // pred_fallthru
      _
    %p846 = scmp.le.s32.totalorder 2, %s13
    // Predicated region
    $region53: #{residual_block.1} parent=5 // pred_check
      %p847 = pneg %p846
    $region54: #{residual_block.1} parent=5 // pred_check_branch
      %849 = sbr.rel (%p847) target = $region56
    $region55: #{residual_block.1} parent=5 // pred_region
      %s850 = ssub.s32 %s13, 2
      // Predicated region
      $region57: #{residual_block.1} parent=55 // pred_check
        %p851 = pneg %p194
      $region58: #{residual_block.1} parent=55 // pred_check_branch
        %853 = sbr.rel (%p851) target = $region60
      $region59: #{residual_block.1} parent=55 // pred_region
        %p854 = scmp.lt.s32.totalorder %s19, 1
        %s855 = scalar_select %p854, %s19, 1
        %s856 = smul.addr %s855, 8
        %s857 = scalar_lea.vmem %s7, %s856
      $region60: #{residual_block.1} parent=55 // pred_fallthru
        _
    $region56: #{residual_block.1} parent=5 // pred_fallthru
      _
  $region6: #{residual_block.1} parent=0 // loop_footer
    %s17 = sadd.s32 1, %s13
  $region7: #{residual_block.1} parent=0 // loop_footer_branch
    %12 = sbr.rel target = $region3
  $region8: #{residual_block.1} parent=0 // loop_exit
    _

</llo_original>
